<compile_context>
chip_gen: v7x
topology: tpu7x:2x2x1
jax: 0.10.0
libtpu: 0.0.40
codegen_flags: <defaults>
</compile_context>

<pallas_src>
import functools

import jax
import jax.numpy as jnp
from jax import lax
from jax.experimental import pallas as pl
from jax.experimental.pallas import tpu as pltpu


def _sim_ce_kernel(img_ref, sen_ref, sen_pair_ref, loss_ref,
                   imgn_ref, diag_ref, sumexp_ref, *, inv_temp: float):
    """One (row-tile, column-tile) step of the tiled similarity cross-entropy.

    Grid = (B // tq, B // tn); row axis "parallel", column axis "arbitrary".
    Residents across the column loop (per row tile):
      imgn_ref   (tq, D) bf16 : normalized image rows * (1/T)   (MXU LHS)
      diag_ref   (tq, 1) f32  : logits[i, i] from the paired sensor rows
      sumexp_ref (tq, 1) f32  : running sum_j exp(logits[i, j] - 1/T)
    """
    j = pl.program_id(1)
    eps2 = 1e-16  # (eps = 1e-8)^2 clamp on each squared norm (see caveat above).

    @pl.when(j == 0)
    def _init():
        # Normalize image rows in f32, fold 1/T, downcast once to bf16.
        img = img_ref[...].astype(jnp.float32)                         # (tq, D)
        inv_i = lax.rsqrt(jnp.maximum(
            jnp.sum(img * img, axis=-1, keepdims=True), eps2))         # (tq, 1)
        img_n = (img * (inv_i * inv_temp)).astype(jnp.bfloat16)
        imgn_ref[...] = img_n

        # Diagonal (target[i] = i) from the paired sensor rows -- once per row
        # tile, using the SAME bf16 operands the matmul consumes.
        sp = sen_pair_ref[...].astype(jnp.float32)                     # (tq, D)
        inv_p = lax.rsqrt(jnp.maximum(
            jnp.sum(sp * sp, axis=-1, keepdims=True), eps2))
        sp_n = (sp * inv_p).astype(jnp.bfloat16)
        diag_ref[...] = jnp.sum(
            img_n.astype(jnp.float32) * sp_n.astype(jnp.float32),
            axis=-1, keepdims=True)                                    # (tq, 1)
        sumexp_ref[...] = jnp.zeros_like(sumexp_ref)

    # Normalize this column tile of sensor rows (f32 math, bf16 MXU operand).
    sen = sen_ref[...].astype(jnp.float32)                             # (tn, D)
    inv_s = lax.rsqrt(jnp.maximum(
        jnp.sum(sen * sen, axis=-1, keepdims=True), eps2))
    sen_n = (sen * inv_s).astype(jnp.bfloat16)

    # (tq, D) x (tn, D) contracting D -> (tq, tn) scaled logits, f32 accum.
    # (Same contraction pattern as the flash-attention reference kernels.)
    logits = lax.dot_general(
        imgn_ref[...], sen_n,
        dimension_numbers=(((1,), (1,)), ((), ())),
        preferred_element_type=jnp.float32)

    # Constant-shift softmax accumulation: logits - 1/T <= ~fp eps.
    sumexp_ref[...] += jnp.sum(jnp.exp(logits - inv_temp),
                               axis=-1, keepdims=True)

    @pl.when(j == pl.num_programs(1) - 1)
    def _finalize():
        lse = inv_temp + jnp.log(sumexp_ref[...])                      # (tq, 1)
        loss_ref[...] = lse - diag_ref[...]                            # per-example


def _choose_tile(n: int, preferred: int) -> int:
    """Largest multiple-of-8 divisor of n that is <= preferred (else n)."""
    if n <= preferred:
        return n
    for t in range(preferred, 7, -1):
        if n % t == 0 and t % 8 == 0:
            return t
    return n


def similarity_based_cross_entropy(image_emb, sensor_emb,
                                   temperature: float = 0.1,
                                   *, tq: int = 256, tn: int = 512):
    """Pallas wrapper. image_emb, sensor_emb: (B, D). Returns scalar f32 loss."""
    assert image_emb.shape == sensor_emb.shape and image_emb.ndim == 2
    B, D = image_emb.shape
    tq = _choose_tile(B, tq)   # row tile (image)   -- 256-aligned where possible
    tn = _choose_tile(B, tn)   # column tile (sensor)
    grid = (B // tq, B // tn)
    inv_temp = 1.0 / float(temperature)

    kernel = functools.partial(_sim_ce_kernel, inv_temp=inv_temp)
    itemsize = jnp.dtype(image_emb.dtype).itemsize
    cost = pl.CostEstimate(
        flops=2 * B * B * D + 6 * B * D,
        transcendentals=B * B + 2 * B,
        bytes_accessed=2 * B * D * itemsize + B * 4)

    per_example = pl.pallas_call(
        kernel,
        out_shape=jax.ShapeDtypeStruct((B, 1), jnp.float32),
        grid_spec=pltpu.PrefetchScalarGridSpec(
            num_scalar_prefetch=0,
            grid=grid,
            in_specs=[
                pl.BlockSpec((tq, D), lambda i, j: (i, 0)),   # image row tile
                pl.BlockSpec((tn, D), lambda i, j: (j, 0)),   # sensor column tile
                pl.BlockSpec((tq, D), lambda i, j: (i, 0)),   # paired sensor rows (diag)
            ],
            out_specs=pl.BlockSpec((tq, 1), lambda i, j: (i, 0)),
            scratch_shapes=[
                pltpu.VMEM((tq, D), jnp.bfloat16),   # normalized image tile (bf16 LHS)
                pltpu.VMEM((tq, 1), jnp.float32),    # diagonal logits
                pltpu.VMEM((tq, 1), jnp.float32),    # running sum(exp(logits - 1/T))
            ]),
        compiler_params=pltpu.CompilerParams(
            dimension_semantics=("parallel", "arbitrary"),
            vmem_limit_bytes=32 * 1024 * 1024),
        cost_estimate=cost,
    )(image_emb, sensor_emb, sensor_emb)

    # Mean reduction over the batch (tiny O(B) op left to XLA).
    return jnp.mean(per_example)


def _reference_loss(image_emb, sensor_emb, temperature=0.1):
    """Pure-JAX f32 reference matching the PyTorch module (sanity check)."""
    eps = 1e-8
    dots = image_emb @ sensor_emb.T
    in_ = jnp.linalg.norm(image_emb, axis=-1, keepdims=True)
    sn_ = jnp.linalg.norm(sensor_emb, axis=-1, keepdims=True)
    sim = dots / jnp.maximum(in_ * sn_.T, eps)
    logits = sim / temperature
    logp = jax.nn.log_softmax(logits, axis=-1)
    B = logits.shape[0]
    return -jnp.mean(logp[jnp.arange(B), jnp.arange(B)])


if __name__ == "__main__":
    key = jax.random.PRNGKey(0)
    k1, k2 = jax.random.split(key)

    B, D = 8, 32  # small batch of paired (image, sensor) embeddings
    image_emb = jax.random.normal(k1, (B, D), dtype=jnp.float32)
    sensor_emb = jax.random.normal(k2, (B, D), dtype=jnp.float32)

    loss = similarity_based_cross_entropy(image_emb, sensor_emb, temperature=0.1)
    loss = jax.block_until_ready(loss)

    ref = _reference_loss(image_emb, sensor_emb, temperature=0.1)
    # Tolerance reflects bf16 MXU operands vs. the pure-f32 reference.
    assert jnp.allclose(loss, ref, rtol=3e-2, atol=3e-2), (loss, ref)

    print("KERNEL_OK")
</pallas_src>

<mosaic_0001>
module attributes {stable_mosaic.version = 11 : i64} {
  func.func @_sim_ce_kernel(%arg0: i32, %arg1: i32, %arg2: memref<8x32xf32, #tpu.memory_space<vmem>>, %arg3: memref<8x32xf32, #tpu.memory_space<vmem>>, %arg4: memref<8x32xf32, #tpu.memory_space<vmem>>, %arg5: memref<8x1xf32, #tpu.memory_space<vmem>>, %arg6: memref<8x32xbf16, #tpu.memory_space<vmem>>, %arg7: memref<8x1xf32, #tpu.memory_space<vmem>>, %arg8: memref<8x1xf32, #tpu.memory_space<vmem>>) attributes {dimension_semantics = [#tpu.dimension_semantics<parallel>, #tpu.dimension_semantics<arbitrary>], iteration_bounds = array<i64: 1, 1>, scalar_prefetch = 0 : i64, scratch_operands = 3 : i64, tpu.core_type = #tpu.core_type<tc>, window_params = [{transform_indices = @transform_0, window_bounds = array<i64: 8, 32>}, {transform_indices = @transform_1, window_bounds = array<i64: 8, 32>}, {transform_indices = @transform_2, window_bounds = array<i64: 8, 32>}, {transform_indices = @transform_3, window_bounds = array<i64: 8, 1>}]} {
    %c0_i32 = arith.constant 0 : i32
    %0 = arith.cmpi eq, %arg1, %c0_i32 : i32
    %1 = arith.extui %0 : i1 to i32
    %c0_i32_0 = arith.constant 0 : i32
    %2 = arith.cmpi ne, %1, %c0_i32_0 : i32
    scf.if %2 {
      %c0_14 = arith.constant 0 : index
      %c0_15 = arith.constant 0 : index
      %26 = vector.load %arg2[%c0_14, %c0_15] : memref<8x32xf32, #tpu.memory_space<vmem>>, vector<8x32xf32>
      %27 = arith.mulf %26, %26 : vector<8x32xf32>
      %cst_16 = arith.constant dense<0.000000e+00> : vector<8xf32>
      %28 = vector.multi_reduction <add>, %27, %cst_16 [1] : vector<8x32xf32> to vector<8xf32>
      %29 = vector.shape_cast %28 : vector<8xf32> to vector<8x1xf32>
      %cst_17 = arith.constant 1.000000e-16 : f32
      %30 = vector.broadcast %cst_17 : f32 to vector<8x1xf32>
      %31 = arith.maximumf %29, %30 : vector<8x1xf32>
      %32 = math.rsqrt %31 : vector<8x1xf32>
      %cst_18 = arith.constant 1.000000e+01 : f32
      %33 = vector.broadcast %cst_18 : f32 to vector<8x1xf32>
      %34 = arith.mulf %32, %33 : vector<8x1xf32>
      %35 = vector.broadcast %34 : vector<8x1xf32> to vector<8x32xf32>
      %36 = arith.mulf %26, %35 : vector<8x32xf32>
      %37 = arith.truncf %36 : vector<8x32xf32> to vector<8x32xbf16>
      %c0_19 = arith.constant 0 : index
      %c0_20 = arith.constant 0 : index
      %38 = vector.load %arg6[%c0_19, %c0_20] : memref<8x32xbf16, #tpu.memory_space<vmem>>, vector<8x32xbf16>
      tpu.vector_store %arg6[%c0_19, %c0_20], %37 {strides = array<i32>} : memref<8x32xbf16, #tpu.memory_space<vmem>>, vector<8x32xbf16>,
      %c0_21 = arith.constant 0 : index
      %c0_22 = arith.constant 0 : index
      %39 = vector.load %arg4[%c0_21, %c0_22] : memref<8x32xf32, #tpu.memory_space<vmem>>, vector<8x32xf32>
      %40 = arith.mulf %39, %39 : vector<8x32xf32>
      %cst_23 = arith.constant dense<0.000000e+00> : vector<8xf32>
      %41 = vector.multi_reduction <add>, %40, %cst_23 [1] : vector<8x32xf32> to vector<8xf32>
      %42 = vector.shape_cast %41 : vector<8xf32> to vector<8x1xf32>
      %cst_24 = arith.constant 1.000000e-16 : f32
      %43 = vector.broadcast %cst_24 : f32 to vector<8x1xf32>
      %44 = arith.maximumf %42, %43 : vector<8x1xf32>
      %45 = math.rsqrt %44 : vector<8x1xf32>
      %46 = vector.broadcast %45 : vector<8x1xf32> to vector<8x32xf32>
      %47 = arith.mulf %39, %46 : vector<8x32xf32>
      %48 = arith.truncf %47 : vector<8x32xf32> to vector<8x32xbf16>
      %49 = arith.extf %37 : vector<8x32xbf16> to vector<8x32xf32>
      %50 = arith.extf %48 : vector<8x32xbf16> to vector<8x32xf32>
      %51 = arith.mulf %49, %50 : vector<8x32xf32>
      %cst_25 = arith.constant dense<0.000000e+00> : vector<8xf32>
      %52 = vector.multi_reduction <add>, %51, %cst_25 [1] : vector<8x32xf32> to vector<8xf32>
      %53 = vector.shape_cast %52 : vector<8xf32> to vector<8x1xf32>
      %c0_26 = arith.constant 0 : index
      %c0_27 = arith.constant 0 : index
      %54 = vector.load %arg7[%c0_26, %c0_27] : memref<8x1xf32, #tpu.memory_space<vmem>>, vector<8x1xf32>
      tpu.vector_store %arg7[%c0_26, %c0_27], %53 {strides = array<i32>} : memref<8x1xf32, #tpu.memory_space<vmem>>, vector<8x1xf32>,
      %cst_28 = arith.constant 0.000000e+00 : f32
      %55 = vector.broadcast %cst_28 : f32 to vector<8x1xf32>
      %c0_29 = arith.constant 0 : index
      %c0_30 = arith.constant 0 : index
      %56 = vector.load %arg8[%c0_29, %c0_30] : memref<8x1xf32, #tpu.memory_space<vmem>>, vector<8x1xf32>
      tpu.vector_store %arg8[%c0_29, %c0_30], %55 {strides = array<i32>} : memref<8x1xf32, #tpu.memory_space<vmem>>, vector<8x1xf32>,
    } else {
    }
    %c0 = arith.constant 0 : index
    %c0_1 = arith.constant 0 : index
    %3 = vector.load %arg3[%c0, %c0_1] : memref<8x32xf32, #tpu.memory_space<vmem>>, vector<8x32xf32>
    %4 = arith.mulf %3, %3 : vector<8x32xf32>
    %cst = arith.constant dense<0.000000e+00> : vector<8xf32>
    %5 = vector.multi_reduction <add>, %4, %cst [1] : vector<8x32xf32> to vector<8xf32>
    %6 = vector.shape_cast %5 : vector<8xf32> to vector<8x1xf32>
    %cst_2 = arith.constant 1.000000e-16 : f32
    %7 = vector.broadcast %cst_2 : f32 to vector<8x1xf32>
    %8 = arith.maximumf %6, %7 : vector<8x1xf32>
    %9 = math.rsqrt %8 : vector<8x1xf32>
    %10 = vector.broadcast %9 : vector<8x1xf32> to vector<8x32xf32>
    %11 = arith.mulf %3, %10 : vector<8x32xf32>
    %12 = arith.truncf %11 : vector<8x32xf32> to vector<8x32xbf16>
    %c0_3 = arith.constant 0 : index
    %c0_4 = arith.constant 0 : index
    %13 = vector.load %arg6[%c0_3, %c0_4] : memref<8x32xbf16, #tpu.memory_space<vmem>>, vector<8x32xbf16>
    %cst_5 = arith.constant dense<0.000000e+00> : vector<8x8xf32>
    %14 = tpu.matmul %13, %12, %cst_5 {dimension_numbers = #tpu.dot_dimension_numbers<[1], [1], [0], [0], [0, 0, 1, 0], [], []>} : vector<8x32xbf16>, vector<8x32xbf16>, vector<8x8xf32> -> vector<8x8xf32>
    %c0_6 = arith.constant 0 : index
    %c0_7 = arith.constant 0 : index
    %15 = vector.load %arg8[%c0_6, %c0_7] : memref<8x1xf32, #tpu.memory_space<vmem>>, vector<8x1xf32>
    %cst_8 = arith.constant 1.000000e+01 : f32
    %16 = vector.broadcast %cst_8 : f32 to vector<8x8xf32>
    %17 = arith.subf %14, %16 : vector<8x8xf32>
    %18 = math.exp %17 : vector<8x8xf32>
    %cst_9 = arith.constant dense<0.000000e+00> : vector<8xf32>
    %19 = vector.multi_reduction <add>, %18, %cst_9 [1] : vector<8x8xf32> to vector<8xf32>
    %20 = vector.shape_cast %19 : vector<8xf32> to vector<8x1xf32>
    %21 = arith.addf %15, %20 : vector<8x1xf32>
    %c0_10 = arith.constant 0 : index
    %c0_11 = arith.constant 0 : index
    %22 = vector.load %arg8[%c0_10, %c0_11] : memref<8x1xf32, #tpu.memory_space<vmem>>, vector<8x1xf32>
    tpu.vector_store %arg8[%c0_10, %c0_11], %21 {strides = array<i32>} : memref<8x1xf32, #tpu.memory_space<vmem>>, vector<8x1xf32>,
    %c0_i32_12 = arith.constant 0 : i32
    %23 = arith.cmpi eq, %arg1, %c0_i32_12 : i32
    %24 = arith.extui %23 : i1 to i32
    %c0_i32_13 = arith.constant 0 : i32
    %25 = arith.cmpi ne, %24, %c0_i32_13 : i32
    scf.if %25 {
      %c0_14 = arith.constant 0 : index
      %c0_15 = arith.constant 0 : index
      %26 = vector.load %arg8[%c0_14, %c0_15] : memref<8x1xf32, #tpu.memory_space<vmem>>, vector<8x1xf32>
      %27 = math.log %26 : vector<8x1xf32>
      %cst_16 = arith.constant 1.000000e+01 : f32
      %28 = vector.broadcast %cst_16 : f32 to vector<8x1xf32>
      %29 = arith.addf %28, %27 : vector<8x1xf32>
      %c0_17 = arith.constant 0 : index
      %c0_18 = arith.constant 0 : index
      %30 = vector.load %arg7[%c0_17, %c0_18] : memref<8x1xf32, #tpu.memory_space<vmem>>, vector<8x1xf32>
      %31 = arith.subf %29, %30 : vector<8x1xf32>
      %c0_19 = arith.constant 0 : index
      %c0_20 = arith.constant 0 : index
      %32 = vector.load %arg5[%c0_19, %c0_20] : memref<8x1xf32, #tpu.memory_space<vmem>>, vector<8x1xf32>
      tpu.vector_store %arg5[%c0_19, %c0_20], %31 {strides = array<i32>} : memref<8x1xf32, #tpu.memory_space<vmem>>, vector<8x1xf32>,
    } else {
    }
    return
  }
  func.func @transform_0(%arg0: i32, %arg1: i32) -> (i32, i32) {
    %c0_i32 = arith.constant 0 : i32
    %c0_i32_0 = arith.constant 0 : i32
    return %arg0, %c0_i32 : i32, i32
  }
  func.func @transform_1(%arg0: i32, %arg1: i32) -> (i32, i32) {
    %c0_i32 = arith.constant 0 : i32
    %c0_i32_0 = arith.constant 0 : i32
    return %arg1, %c0_i32 : i32, i32
  }
  func.func @transform_2(%arg0: i32, %arg1: i32) -> (i32, i32) {
    %c0_i32 = arith.constant 0 : i32
    %c0_i32_0 = arith.constant 0 : i32
    return %arg0, %c0_i32 : i32, i32
  }
  func.func @transform_3(%arg0: i32, %arg1: i32) -> (i32, i32) {
    %c0_i32 = arith.constant 0 : i32
    %c0_i32_0 = arith.constant 0 : i32
    return %arg0, %c0_i32 : i32, i32
  }
}

</mosaic_0001>

<llo_original>
// kernel: tpu_custom_call.1
$region0: #{tpu_custom_call.1}
  #allocation0 [shape = 'u32[]', space=smem, size = 0x4, offset = 0x4, fixed_abs, tag = 'smem constant byte address 0x4 - core index']
  #allocation1 [shape = 'u32[144,128]{1,0:T(1,128)}', space=vmem, size = 0x12000, scoped, tag = 'internal scratch']
  #allocation2 [shape = 'bf16[8,32]{1,0:T(8,128)(2,1)}', space=vmem, size = 0x800, scoped, tag = 'scratch operand']
  #allocation3 [shape = 'f32[8,1]{1,0:T(8,128)}', space=vmem, size = 0x1000, scoped, tag = 'scratch operand']
  #allocation4 [shape = 'f32[8,1]{1,0:T(8,128)}', space=vmem, size = 0x1000, scoped, tag = 'scratch operand']
  %s0 = inlined_call_operand.hbm [shape: f32[8,32], index: 0, kind: input, shape index: {}]
  %s1 = inlined_call_operand.hbm [shape: f32[8,32], index: 1, kind: input, shape index: {}]
  %s2 = inlined_call_operand.hbm [shape: f32[8,32], index: 2, kind: input, shape index: {}]
  %s3 = inlined_call_operand.vmem [shape: f32[8,1], index: 3, kind: output, shape index: {}]
  %s4 = sld [smem:[#allocation0]]
  $region42: #{tpu_custom_call.1} parent=0
    _
  %s6 = ssub.s32 1, %s4
  %s7 = scalar_select 0, %s6, %s4
  $region1: #{tpu_custom_call.1} parent=0
    #allocation5 [shape = 'u8[4096]{0}', space=vmem, size = 0x1000, scoped, tag = 'input window, operand 0, single buffered']
    #allocation6 [shape = 's32[1]{0}', space=sflag, size = 0x4, scoped, tag = 'scoped memory for tpu_custom_call.1']
    #allocation7 [shape = 'u8[4096]{0}', space=vmem, size = 0x1000, scoped, tag = 'input window, operand 1, single buffered']
    #allocation8 [shape = 's32[1]{0}', space=sflag, size = 0x4, scoped, tag = 'scoped memory for tpu_custom_call.1']
    #allocation9 [shape = 'u8[4096]{0}', space=vmem, size = 0x1000, scoped, tag = 'input window, operand 2, single buffered']
    %8 = vsyncpa [#allocation6], 0
    %9 = vsyncpa [#allocation8], 0
    // Predicated region
    $region2: #{tpu_custom_call.1} parent=1 // pred_check
      _
    $region3: #{tpu_custom_call.1} parent=1 // pred_check_branch
      %11 = sbr.rel (0) target = $region5
    $region4: #{tpu_custom_call.1} parent=1 // pred_region
      %s13 = ssub.s32 128, 128
      %14 = vsyncadd [#allocation6], %s13
      %s16 = sshll.u32 [#allocation5], 4
      %s17 = int_to_ptr.vmem [resolvable:$true] %s16
      %19 = dma.hbm_to_vmem [thread:$0]  %s0, 128, %s17, [#allocation6]
    $region5: #{tpu_custom_call.1} parent=1 // pred_fallthru
      _
    // Predicated region
    $region6: #{tpu_custom_call.1} parent=1 // pred_check
      _
    $region7: #{tpu_custom_call.1} parent=1 // pred_check_branch
      %21 = sbr.rel (0) target = $region9
    $region8: #{tpu_custom_call.1} parent=1 // pred_region
      %s23 = ssub.s32 128, 128
      %24 = vsyncadd [#allocation8], %s23
      %s26 = sshll.u32 [#allocation7], 4
      %s27 = int_to_ptr.vmem [resolvable:$true] %s26
      %29 = dma.hbm_to_vmem [thread:$0]  %s1, 128, %s27, [#allocation8]
    $region9: #{tpu_custom_call.1} parent=1 // pred_fallthru
      _
    // Predicated region
    $region10: #{tpu_custom_call.1} parent=1 // pred_check
      _
    $region11: #{tpu_custom_call.1} parent=1 // pred_check_branch
      %31 = sbr.rel (0) target = $region13
    $region12: #{tpu_custom_call.1} parent=1 // pred_region
      %s33 = ssub.s32 128, 128
      %34 = vsyncadd [#allocation8], %s33
      %s36 = sshll.u32 [#allocation9], 4
      %s37 = int_to_ptr.vmem [resolvable:$true] %s36
      %39 = dma.hbm_to_vmem [thread:$0]  %s2, 128, %s37, [#allocation8]
    $region13: #{tpu_custom_call.1} parent=1 // pred_fallthru
      _
    // Predicated region
    $region14: #{tpu_custom_call.1} parent=1 // pred_check
      _
    $region15: #{tpu_custom_call.1} parent=1 // pred_check_branch
      %41 = sbr.rel (0) target = $region17
    $region16: #{tpu_custom_call.1} parent=1 // pred_region
      %42 = dma.done [#allocation6], 128
    $region17: #{tpu_custom_call.1} parent=1 // pred_fallthru
      _
    // Predicated region
    $region18: #{tpu_custom_call.1} parent=1 // pred_check
      _
    $region19: #{tpu_custom_call.1} parent=1 // pred_check_branch
      %44 = sbr.rel (0) target = $region21
    $region20: #{tpu_custom_call.1} parent=1 // pred_region
      %45 = dma.done [#allocation8], 128
    $region21: #{tpu_custom_call.1} parent=1 // pred_fallthru
      _
    // Predicated region
    $region22: #{tpu_custom_call.1} parent=1 // pred_check
      _
    $region23: #{tpu_custom_call.1} parent=1 // pred_check_branch
      %47 = sbr.rel (0) target = $region25
    $region24: #{tpu_custom_call.1} parent=1 // pred_region
      %48 = dma.done [#allocation8], 128
    $region25: #{tpu_custom_call.1} parent=1 // pred_fallthru
      _
    %p50 = scmp.eq.s32.totalorder 0, 0
    // Predicated region
    $region26: #{tpu_custom_call.1} parent=1 // pred_check
      %p51 = pneg %p50
    $region27: #{tpu_custom_call.1} parent=1 // pred_check_branch
      %53 = sbr.rel (%p51) target = $region29
    $region28: #{tpu_custom_call.1} parent=1 // pred_region
      %v54 = vld [vmem:[#allocation5] sm:$0xff]
      %v55 = vmul.f32 %v54, %v54
      %vm56 = vcmask 261120
      %v57 = vsel %vm56, %v55, 0.0
      %58 = vadd.xlane.f32.xlu0 %v57
      %v59 = vpop.xlane.xlu0 %58
      %v60 = vmax.f32 %v59, 1e-16
      %v61 = vrsqrt.pop %v60
      %v62 = vmul.f32 %v61, 10.0
      %v63 = vmul.f32 %v54, %v62
      %v64 = vpack.c.bf16 %v63, %v63
      %vm65 = vcmask 257024
      %66 = vst.msk [vmem:[#allocation2] sm:$0xf] %vm65, %v64
      %v67 = vld [vmem:[#allocation9] sm:$0xff]
      %v68 = vmul.f32 %v67, %v67
      %v69 = vsel %vm56, %v68, 0.0
      %70 = vadd.xlane.f32.xlu0 %v69
      %v71 = vpop.xlane.xlu0 %70
      %v72 = vmax.f32 %v71, 1e-16
      %v73 = vrsqrt.pop %v72
      %v74 = vmul.f32 %v67, %v73
      %v75 = vpack.c.bf16 %v74, %v74
      %v76 = vunpack.c.l.bf16 %v64
      %v77 = vunpack.c.l.bf16 %v75
      %v78 = vmul.f32 %v76, %v77
      %v79 = vsel %vm56, %v78, 0.0
      %80 = vadd.xlane.f32.xlu0 %v79
      %v81 = vpop.xlane.xlu0 %80
      %vm82 = vcmask 7168
      %83 = vst.msk [vmem:[#allocation3] sm:$0xff] %vm82, %v81
      %84 = vst.msk [vmem:[#allocation4] sm:$0xff] %vm82, 0.0
    $region29: #{tpu_custom_call.1} parent=1 // pred_fallthru
      _
    %v85 = vld [vmem:[#allocation7] sm:$0xff]
    %v86 = vmul.f32 %v85, %v85
    %vm87 = vcmask 261120
    %v88 = vsel %vm87, %v86, 0.0
    %89 = vadd.xlane.f32.xlu0 %v88
    %v90 = vpop.xlane.xlu0 %89
    %v91 = vmax.f32 %v90, 1e-16
    %v92 = vrsqrt.pop %v91
    %v93 = vmul.f32 %v85, %v92
    %v94 = vpack.c.bf16 %v93, %v93
    %v95 = vld [vmem:[#allocation2] sm:$0xf]
    %v97 = vsel %vm87, %v95, 0
    %v100 = vsel %vm87, %v94, 0
    %102 = vmatprep.subr.bf16.mxu0 0
    %103 = vmatpush1.bf16.xpose.msra.mxu0 %v100
    %104 = vmatprep.subr.bf16.mxu0 0
    %105 = vmatpush1.bf16.xpose.msra.mxu0 0
    %106 = vmatprep.subr.bf16.mxu0 0
    %107 = vmatpush1.bf16.xpose.msra.mxu0 0
    %108 = vmatprep.subr.bf16.mxu0 0
    %109 = vmatpush1.bf16.xpose.msra.mxu0 0
    %110 = vmatprep.subr.bf16.mxu0 0
    %111 = vmatpush1.bf16.xpose.msra.mxu0 0
    %112 = vmatprep.subr.bf16.mxu0 0
    %113 = vmatpush1.bf16.xpose.msra.mxu0 0
    %114 = vmatprep.subr.bf16.mxu0 0
    %115 = vmatpush1.bf16.xpose.msra.mxu0 0
    %116 = vmatprep.subr.bf16.mxu0 0
    %117 = vmatpush1.bf16.xpose.msra.mxu0 0
    %118 = vmatprep.subr.bf16.mxu0 0
    %119 = vmatpush1.bf16.xpose.msra.mxu0 0
    %120 = vmatprep.subr.bf16.mxu0 0
    %121 = vmatpush1.bf16.xpose.msra.mxu0 0
    %122 = vmatprep.subr.bf16.mxu0 0
    %123 = vmatpush1.bf16.xpose.msra.mxu0 0
    %124 = vmatprep.subr.bf16.mxu0 0
    %125 = vmatpush1.bf16.xpose.msra.mxu0 0
    %126 = vmatprep.subr.bf16.mxu0 0
    %127 = vmatpush1.bf16.xpose.msra.mxu0 0
    %128 = vmatprep.subr.bf16.mxu0 0
    %129 = vmatpush1.bf16.xpose.msra.mxu0 0
    %130 = vmatprep.subr.bf16.mxu0 0
    %131 = vmatpush1.bf16.xpose.msra.mxu0 0
    %132 = vmatprep.subr.bf16.mxu0 0
    %133 = vmatpush1.bf16.xpose.msra.mxu0 0
    %134 = vmatprep.mubr.bf16.mxu0 0
    %135 = vmatmul.mubr.bf16.gmra.mrb[0].mxu0 %v97
    %v136 = vpop.f32.mrb[0].mxu0
    %v137 = vadd.f32 0.0, %v136
    %v138 = vpop.f32.mrb[0].mxu0
    %v139 = vpop.f32.mrb[0].mxu0
    %v140 = vpop.f32.mrb[0].mxu0
    %141 = vdwg.mxu0
    %v142 = vld [vmem:[#allocation4] sm:$0xff]
    %v143 = vsub.f32 %v137, 10.0
    %v144 = vmul.f32 %v143, 1.442695
    %v145 = vpow.pop %v144
    %vm146 = vcmask 64512
    %v147 = vsel %vm146, %v145, 0.0
    %148 = vadd.xlane.f32.xlu0 %v147
    %v149 = vpop.xlane.xlu0 %148
    %v150 = vadd.f32 %v142, %v149
    %vm151 = vcmask 7168
    %152 = vst.msk [vmem:[#allocation4] sm:$0xff] %vm151, %v150
    // Predicated region
    $region30: #{tpu_custom_call.1} parent=1 // pred_check
      %p153 = pneg %p50
    $region31: #{tpu_custom_call.1} parent=1 // pred_check_branch
      %155 = sbr.rel (%p153) target = $region33
    $region32: #{tpu_custom_call.1} parent=1 // pred_region
      %v156 = vld [vmem:[#allocation4] sm:$0xff]
      %v157 = vlog2.pop %v156
      %v158 = vmul.f32 %v157, 0.6931472
      %v159 = vadd.f32 %v158, 10.0
      %v160 = vld [vmem:[#allocation3] sm:$0xff]
      %v161 = vsub.f32 %v159, %v160
      %162 = vst.msk [vmem:[%s3] sm:$0xff] %vm151, %v161
    $region33: #{tpu_custom_call.1} parent=1 // pred_fallthru
      _
    // Predicated region
    $region34: #{tpu_custom_call.1} parent=1 // pred_check
      _
    $region35: #{tpu_custom_call.1} parent=1 // pred_check_branch
      %164 = sbr.rel (0) target = $region37
    $region36: #{tpu_custom_call.1} parent=1 // pred_region
      _
    $region37: #{tpu_custom_call.1} parent=1 // pred_fallthru
      _
    // Predicated region
    $region38: #{tpu_custom_call.1} parent=1 // pred_check
      _
    $region39: #{tpu_custom_call.1} parent=1 // pred_check_branch
      %166 = sbr.rel (0) target = $region41
    $region40: #{tpu_custom_call.1} parent=1 // pred_region
      _
    $region41: #{tpu_custom_call.1} parent=1 // pred_fallthru
      _
    %167 = vsyncpa [#allocation6], 1
    %168 = vsyncpa [#allocation8], 1

</llo_original>
